<compile_context>
chip_gen: v6e
topology: v6e:2x2x1
jax: 0.10.0
libtpu: 0.0.40
codegen_flags: <defaults>
</compile_context>

<pallas_src>
import jax
import jax.numpy as jnp
from jax.experimental import pallas as pl
from jax.experimental.pallas import tpu as pltpu  # noqa: F401  (TPU backend)


# ---------------- Pallas kernels ----------------

def _tanh_kernel(y_ref, o_ref):
    o_ref[...] = jnp.tanh(y_ref[...])


def _relu_kernel(y_ref, o_ref):
    zero = jnp.zeros((), dtype=y_ref.dtype)      # dtype-safe (no promotion)
    o_ref[...] = jnp.maximum(y_ref[...], zero)


def _cat_self_kernel(x_ref, o_ref):
    # torch.cat((x, x), dim=1), emitted directly in the final output layout:
    #   x_ref : (b, c,  *rest)  -> single load
    #   o_ref : (b, 2c, *rest)  -> two direct static-slice stores
    # No broadcast_to / extra vreg copy, no post-kernel reshape needed.
    xv = x_ref[...]
    c = x_ref.shape[1]
    trail = (slice(None),) * (len(x_ref.shape) - 2)
    o_ref[(slice(None), slice(0, c)) + trail] = xv
    o_ref[(slice(None), slice(c, 2 * c)) + trail] = xv


# ---------------- Wrappers ----------------
# Shapes here are tiny (far below one (8,128) tile), so a single whole-array
# block is optimal: any grid/tiling would only add ~0.35us per-step overhead.
# TODO(synk): for large inputs, add a grid with lane-dense tiles
# (rows %8, cols %128, ~512-wide f32), dimension_semantics=("parallel",...),
# and on v5e/v7x re-size tiles against the smaller scoped-VMEM defaults.

def cat_self_dim1(x):
    """jnp equivalent of torch.cat((x, x), dim=1) in one pallas_call."""
    out_shape = (x.shape[0], 2 * x.shape[1]) + tuple(x.shape[2:])
    return pl.pallas_call(
        _cat_self_kernel,
        out_shape=jax.ShapeDtypeStruct(out_shape, x.dtype),
        in_specs=[pl.BlockSpec(tuple(x.shape), lambda: (0,) * x.ndim)],
        out_specs=pl.BlockSpec(out_shape, lambda: (0,) * len(out_shape)),
    )(x)


def _activation(kernel, y2):
    """One pallas_call applying `kernel` elementwise to a 2-D tensor."""
    return pl.pallas_call(
        kernel,
        out_shape=jax.ShapeDtypeStruct(y2.shape, y2.dtype),
        in_specs=[pl.BlockSpec(y2.shape, lambda: (0, 0))],
        out_specs=pl.BlockSpec(y2.shape, lambda: (0, 0)),
    )(y2)


@jax.jit
def model_forward(x, y):
    """Mirrors Model.forward exactly; launches exactly one Pallas kernel."""
    # Shape of torch.cat((x, x), dim=1), derived arithmetically (no kernel
    # launched unless the cat result is actually returned).
    x_cat_shape = (x.shape[0], 2 * x.shape[1]) + tuple(x.shape[2:])

    if tuple(y.shape) != (1, 3):
        return _activation(_relu_kernel, y.reshape(y.shape[0], -1))   # .relu()
    elif x_cat_shape != (1, 4):
        return _activation(_tanh_kernel, y.reshape(y.shape[0], -1))   # .tanh()
    else:
        return cat_self_dim1(x)                                       # the cat


if __name__ == "__main__":
    key = jax.random.PRNGKey(0)
    kx, ky = jax.random.split(key)

    # Shapes match the PyTorch reference: x = randn(2,3,4), y = randn(1,3)
    x = jax.random.normal(kx, (2, 3, 4), dtype=jnp.float32)
    y = jax.random.normal(ky, (1, 3), dtype=jnp.float32)

    # y.shape == (1,3) and cat(x,x).shape == (2,6,4) != (1,4)
    # -> forward returns tanh(y.view(1,-1)); only the tanh kernel runs.
    out = jax.block_until_ready(model_forward(x, y))
    expected = jnp.tanh(y.reshape(1, -1))
    assert out.shape == (1, 3), out.shape
    assert jnp.allclose(out, expected, atol=1e-5, rtol=1e-5), "tanh branch mismatch"

    # Exercise the relu branch (y.shape != (1,3)); jit retraces for new shape.
    y2 = jax.random.normal(ky, (2, 5), dtype=jnp.float32)
    out_relu = jax.block_until_ready(model_forward(x, y2))
    assert jnp.allclose(out_relu, jnp.maximum(y2, 0.0)), "relu branch mismatch"

    # Sanity-check the direct-layout cat kernel against jnp.concatenate.
    x_cat = jax.block_until_ready(jax.jit(cat_self_dim1)(x))
    assert x_cat.shape == (2, 6, 4), x_cat.shape
    assert jnp.allclose(x_cat, jnp.concatenate([x, x], axis=1)), "cat kernel mismatch"

    print("KERNEL_OK")
</pallas_src>

<mosaic_0001>
module attributes {stable_mosaic.version = 11 : i64} {
  func.func @_tanh_kernel(%arg0: memref<1x3xf32, #tpu.memory_space<vmem>>, %arg1: memref<1x3xf32, #tpu.memory_space<vmem>>) attributes {dimension_semantics = [], scalar_prefetch = 0 : i64, scratch_operands = 0 : i64, tpu.core_type = #tpu.core_type<tc>} {
    %c0 = arith.constant 0 : index
    %c0_0 = arith.constant 0 : index
    %0 = vector.load %arg0[%c0, %c0_0] : memref<1x3xf32, #tpu.memory_space<vmem>>, vector<1x3xf32>
    %1 = math.tanh %0 : vector<1x3xf32>
    %c0_1 = arith.constant 0 : index
    %c0_2 = arith.constant 0 : index
    %2 = vector.load %arg1[%c0_1, %c0_2] : memref<1x3xf32, #tpu.memory_space<vmem>>, vector<1x3xf32>
    tpu.vector_store %arg1[%c0_1, %c0_2], %1 {strides = array<i32>} : memref<1x3xf32, #tpu.memory_space<vmem>>, vector<1x3xf32>,
    return
  }
}

</mosaic_0001>

<llo_original>
// kernel: model_forward.1
$region0: #{model_forward.1}
  #allocation0 [shape = 'u32[]', space=smem, size = 0x4, offset = 0x4, fixed_abs, tag = 'smem constant byte address 0x4 - core index']
  #allocation1 [shape = 'u32[144,128]{1,0:T(1,128)}', space=vmem, size = 0x12000, scoped, tag = 'internal scratch']
  %s0 = inlined_call_operand.hbm [shape: f32[1,3], index: 0, kind: input, shape index: {}]
  %s1 = inlined_call_operand.hbm [shape: f32[1,3], index: 1, kind: output, shape index: {}]
  %s2 = sld [smem:[#allocation0]]
  $region18: #{model_forward.1} parent=0
    _
  %s4 = ssub.s32 1, %s2
  %s5 = scalar_select 0, %s4, %s2
  $region1: #{model_forward.1} parent=0
    #allocation2 [shape = 'u8[512]{0}', space=vmem, size = 0x400, scoped, tag = 'input window, operand 0, single buffered']
    #allocation3 [shape = 's32[1]{0}', space=sflag, size = 0x4, scoped, tag = 'scoped memory for model_forward.1']
    #allocation4 [shape = 's32[1]{0}', space=sflag, size = 0x4, scoped, tag = 'scoped memory for model_forward.1']
    #allocation5 [shape = 'u8[512]{0}', space=vmem, size = 0x400, scoped, tag = 'output window, operand 0, single buffered']
    %6 = vsyncpa [#allocation3], 0
    %7 = vsyncpa [#allocation4], 0
    // Predicated region
    $region2: #{model_forward.1} parent=1 // pred_check
      _
    $region3: #{model_forward.1} parent=1 // pred_check_branch
      %9 = sbr.rel (0) target = $region5
    $region4: #{model_forward.1} parent=1 // pred_region
      %s11 = ssub.s32 16, 16
      %12 = vsyncadd [#allocation3], %s11
      %s14 = sshll.u32 [#allocation2], 4
      %s15 = int_to_ptr.vmem [resolvable:$true] %s14
      %17 = dma.hbm_to_vmem [thread:$0]  %s0, 16, %s15, [#allocation3]
    $region5: #{model_forward.1} parent=1 // pred_fallthru
      _
    // Predicated region
    $region6: #{model_forward.1} parent=1 // pred_check
      _
    $region7: #{model_forward.1} parent=1 // pred_check_branch
      %19 = sbr.rel (0) target = $region9
    $region8: #{model_forward.1} parent=1 // pred_region
      %20 = dma.done [#allocation3], 16
    $region9: #{model_forward.1} parent=1 // pred_fallthru
      _
    %v21 = vld [vmem:[#allocation2] sm:$0x1]
    %v22 = vtanh.pop %v21
    %vm23 = vcmask 16384
    %24 = vst.msk [vmem:[#allocation5] sm:$0x1] %vm23, %v22
    // Predicated region
    $region10: #{model_forward.1} parent=1 // pred_check
      _
    $region11: #{model_forward.1} parent=1 // pred_check_branch
      %26 = sbr.rel (0) target = $region13
    $region12: #{model_forward.1} parent=1 // pred_region
      %s28 = ssub.s32 16, 16
      %29 = vsyncadd [#allocation4], %s28
      %s31 = sshll.u32 [#allocation5], 4
      %s32 = int_to_ptr.vmem [resolvable:$true] %s31
      %34 = dma.vmem_to_hbm [thread:$0]  %s32, 16, %s1, [#allocation4]
    $region13: #{model_forward.1} parent=1 // pred_fallthru
      _
    // Predicated region
    $region14: #{model_forward.1} parent=1 // pred_check
      _
    $region15: #{model_forward.1} parent=1 // pred_check_branch
      %36 = sbr.rel (0) target = $region17
    $region16: #{model_forward.1} parent=1 // pred_region
      %37 = dma.done [#allocation4], 16
    $region17: #{model_forward.1} parent=1 // pred_fallthru
      _
    %38 = vsyncpa [#allocation3], 1
    %39 = vsyncpa [#allocation4], 1

</llo_original>
